<compile_context>
chip_gen: v6e
topology: v6e:2x2x1
jax: 0.10.0
libtpu: 0.0.40
codegen_flags: <defaults>
</compile_context>

<pallas_src>
import jax
import jax.numpy as jnp
from jax.experimental import pallas as pl
from jax.experimental.pallas import tpu as pltpu


def _gather_rows_kernel(x_ref, o_ref):
    # x_ref: (bb, D) VMEM tile — the chosen time-step row for bb batch elements.
    # o_ref: (bb, D) output tile.
    o_ref[...] = x_ref[...]


def _gather_rows_kernel_3d(x_ref, o_ref):
    # Fallback path (lane-unaligned D): x_ref is (bb, 1, D), o_ref is (bb, D).
    o_ref[...] = x_ref[:, 0, :]


def choose_specific_time_step(x, time_step_to_choose: int, *, block_b: int = 256):
    """Pallas implementation of ChooseSpecificTimeStepFromVector.forward.

    Returns (x, x[:, time_step_to_choose, :]).
    """
    B, T, D = x.shape
    assert 0 <= time_step_to_choose < T

    # Batch blocking: >=8 rows per block -> dense (unmasked) sublane stores;
    # for tiny B use the full batch in a single block (full-dim blocks are
    # always layout-legal).
    if B <= 8:
        bb = B
    else:
        bb = min(block_b, B)
        bb -= bb % 8
    grid = (pl.cdiv(B, bb),)
    cparams = pltpu.CompilerParams(dimension_semantics=("parallel",))

    if D % 128 == 0:
        # View x as (B, T*D): a free row-major collapse. The selected time step
        # of batch b is the lane-aligned slab x2d[b, t*D:(t+1)*D], which the
        # index_map addresses directly, so only bb*D elements are DMA'd per
        # grid step (never the full (T, D) tile).
        x2d = x.reshape(B, T * D)
        sel = pl.pallas_call(
            _gather_rows_kernel,
            out_shape=jax.ShapeDtypeStruct((B, D), x.dtype),
            grid=grid,
            in_specs=[pl.BlockSpec((bb, D), lambda i: (i, time_step_to_choose))],
            out_specs=pl.BlockSpec((bb, D), lambda i: (i, 0)),
            compiler_params=cparams,
        )(x2d)
    else:
        # Lane-unaligned D: keep the 3-D view so the block's last dim equals D
        # (full-dim), and select the time step via the index_map.
        sel = pl.pallas_call(
            _gather_rows_kernel_3d,
            out_shape=jax.ShapeDtypeStruct((B, D), x.dtype),
            grid=grid,
            in_specs=[
                pl.BlockSpec((bb, 1, D), lambda i: (i, time_step_to_choose, 0))
            ],
            out_specs=pl.BlockSpec((bb, D), lambda i: (i, 0)),
            compiler_params=cparams,
        )(x)

    # First output is the unchanged input: no kernel copy, no extra HBM traffic.
    return x, sel


if __name__ == "__main__":
    # Small (batch, seq, hidden) shapes consistent with the module's input.
    B, T, D = 8, 8, 128
    time_step_to_choose = 3

    key = jax.random.PRNGKey(0)
    x = jax.random.normal(key, (B, T, D), dtype=jnp.float32)

    out_full, out_sel = choose_specific_time_step(x, time_step_to_choose)
    out_full = jax.block_until_ready(out_full)
    out_sel = jax.block_until_ready(out_sel)

    # Reference check against plain-JAX semantics of the PyTorch module.
    ref_full = x
    ref_sel = x[:, time_step_to_choose, :]
    assert out_full.shape == (B, T, D) and out_sel.shape == (B, D)
    assert jnp.array_equal(out_full, ref_full)
    assert jnp.allclose(out_sel, ref_sel)

    print("KERNEL_OK")
</pallas_src>

<mosaic_0001>
module attributes {stable_mosaic.version = 11 : i64} {
  func.func @_gather_rows_kernel(%arg0: i32, %arg1: memref<8x128xf32, #tpu.memory_space<vmem>>, %arg2: memref<8x128xf32, #tpu.memory_space<vmem>>) attributes {dimension_semantics = [#tpu.dimension_semantics<parallel>], iteration_bounds = array<i64: 1>, scalar_prefetch = 0 : i64, scratch_operands = 0 : i64, tpu.core_type = #tpu.core_type<tc>, window_params = [{transform_indices = @transform_0, window_bounds = array<i64: 8, 128>}, {transform_indices = @transform_1, window_bounds = array<i64: 8, 128>}]} {
    %c0 = arith.constant 0 : index
    %c0_0 = arith.constant 0 : index
    %0 = vector.load %arg1[%c0, %c0_0] : memref<8x128xf32, #tpu.memory_space<vmem>>, vector<8x128xf32>
    %c0_1 = arith.constant 0 : index
    %c0_2 = arith.constant 0 : index
    %1 = vector.load %arg2[%c0_1, %c0_2] : memref<8x128xf32, #tpu.memory_space<vmem>>, vector<8x128xf32>
    tpu.vector_store %arg2[%c0_1, %c0_2], %0 {strides = array<i32>} : memref<8x128xf32, #tpu.memory_space<vmem>>, vector<8x128xf32>,
    return
  }
  func.func @transform_0(%arg0: i32) -> (i32, i32) {
    %c3_i32 = arith.constant 3 : i32
    %c0_i32 = arith.constant 0 : i32
    return %arg0, %c3_i32 : i32, i32
  }
  func.func @transform_1(%arg0: i32) -> (i32, i32) {
    %c0_i32 = arith.constant 0 : i32
    %c0_i32_0 = arith.constant 0 : i32
    return %arg0, %c0_i32 : i32, i32
  }
}

</mosaic_0001>

<llo_original>
// kernel: tpu_custom_call.1
$region0: #{tpu_custom_call.1}
  #allocation0 [shape = 'u32[]', space=smem, size = 0x4, offset = 0x4, fixed_abs, tag = 'smem constant byte address 0x4 - core index']
  #allocation1 [shape = 'u32[144,128]{1,0:T(1,128)}', space=vmem, size = 0x12000, scoped, tag = 'internal scratch']
  %s0 = inlined_call_operand.hbm [shape: f32[8,1024], index: 0, kind: input, shape index: {}]
  %s1 = inlined_call_operand.hbm [shape: f32[8,128], index: 1, kind: output, shape index: {}]
  %s2 = sld [smem:[#allocation0]]
  $region18: #{tpu_custom_call.1} parent=0
    _
  %s4 = ssub.s32 1, %s2
  %s5 = scalar_select 0, %s4, %s2
  $region1: #{tpu_custom_call.1} parent=0
    #allocation2 [shape = 'u8[4096]{0}', space=vmem, size = 0x1000, scoped, tag = 'input window, operand 0, single buffered']
    #allocation3 [shape = 's32[1]{0}', space=sflag, size = 0x4, scoped, tag = 'scoped memory for tpu_custom_call.1']
    #allocation4 [shape = 's32[1]{0}', space=sflag, size = 0x4, scoped, tag = 'scoped memory for tpu_custom_call.1']
    #allocation5 [shape = 'u8[4096]{0}', space=vmem, size = 0x1000, scoped, tag = 'output window, operand 0, single buffered']
    %6 = vsyncpa [#allocation3], 0
    %7 = vsyncpa [#allocation4], 0
    // Predicated region
    $region2: #{tpu_custom_call.1} parent=1 // pred_check
      _
    $region3: #{tpu_custom_call.1} parent=1 // pred_check_branch
      %9 = sbr.rel (0) target = $region5
    $region4: #{tpu_custom_call.1} parent=1 // pred_region
      %s11 = ssub.s32 128, 128
      %12 = vsyncadd [#allocation3], %s11
      %s13 = scalar_lea.hbm %s0, 384
      %s15 = sshll.u32 [#allocation2], 4
      %s16 = int_to_ptr.vmem [resolvable:$true] %s15
      %18 = dma.hbm_to_vmem [thread:$0]  %s13, 128, %s16, [#allocation3]
    $region5: #{tpu_custom_call.1} parent=1 // pred_fallthru
      _
    // Predicated region
    $region6: #{tpu_custom_call.1} parent=1 // pred_check
      _
    $region7: #{tpu_custom_call.1} parent=1 // pred_check_branch
      %20 = sbr.rel (0) target = $region9
    $region8: #{tpu_custom_call.1} parent=1 // pred_region
      %21 = dma.done [#allocation3], 128
    $region9: #{tpu_custom_call.1} parent=1 // pred_fallthru
      _
    %v22 = vld [vmem:[#allocation2] sm:$0xff]
    %23 = vst [vmem:[#allocation5] sm:$0xff] %v22
    // Predicated region
    $region10: #{tpu_custom_call.1} parent=1 // pred_check
      _
    $region11: #{tpu_custom_call.1} parent=1 // pred_check_branch
      %25 = sbr.rel (0) target = $region13
    $region12: #{tpu_custom_call.1} parent=1 // pred_region
      %s27 = ssub.s32 128, 128
      %28 = vsyncadd [#allocation4], %s27
      %s30 = sshll.u32 [#allocation5], 4
      %s31 = int_to_ptr.vmem [resolvable:$true] %s30
      %33 = dma.vmem_to_hbm [thread:$0]  %s31, 128, %s1, [#allocation4]
    $region13: #{tpu_custom_call.1} parent=1 // pred_fallthru
      _
    // Predicated region
    $region14: #{tpu_custom_call.1} parent=1 // pred_check
      _
    $region15: #{tpu_custom_call.1} parent=1 // pred_check_branch
      %35 = sbr.rel (0) target = $region17
    $region16: #{tpu_custom_call.1} parent=1 // pred_region
      %36 = dma.done [#allocation4], 128
    $region17: #{tpu_custom_call.1} parent=1 // pred_fallthru
      _
    %37 = vsyncpa [#allocation3], 1
    %38 = vsyncpa [#allocation4], 1

</llo_original>
